<compile_context>
chip_gen: v6e
topology: v6e:2x2x1
jax: 0.10.0
libtpu: 0.0.40
codegen_flags: <defaults>
</compile_context>

<pallas_src>
import jax
import jax.numpy as jnp
from jax.experimental import pallas as pl
from jax.experimental.pallas import tpu as pltpu


def _round_up(x, m):
    return ((x + m - 1) // m) * m


def _mix32(x):
    """Murmur3-style 32-bit finalizer (xorshift-multiply); bijective on uint32."""
    x = x ^ (x >> jnp.uint32(16))
    x = x * jnp.uint32(0x7FEB352D)
    x = x ^ (x >> jnp.uint32(15))
    x = x * jnp.uint32(0x846CA68B)
    x = x ^ (x >> jnp.uint32(16))
    return x


def _dropout_half(y, seed_u32, row_offset):
    """Inverted dropout, p = 0.5: keep w.p. 0.5 and scale kept values by 2.

    The keep decision is a pure function of (layer seed, global element index),
    so results do not depend on the row-tile size.
    """
    m, n = y.shape
    row = jax.lax.broadcasted_iota(jnp.int32, (m, n), 0) + row_offset
    col = jax.lax.broadcasted_iota(jnp.int32, (m, n), 1)
    idx = (row * n + col).astype(jnp.uint32)
    h = _mix32(_mix32(idx) ^ seed_u32)
    keep = (h >> jnp.uint32(31)) == jnp.uint32(0)        # sign bit test -> P(keep)=0.5
    return y * jnp.where(keep, jnp.float32(2.0), jnp.float32(0.0))


def _prenet_fused_kernel(seeds_ref, x_ref, w1_ref, w2_ref, o_ref):
    """Fused 2-layer Prenet on one row tile.

    x_ref : [tm, K]  f32 row tile of the flattened input
    w1_ref: [K, N1]  bf16 (resident across the whole grid)
    w2_ref: [N1, N2] bf16 (resident across the whole grid)
    o_ref : [tm, N2] f32
    """
    tm = x_ref.shape[0]
    row0 = pl.program_id(0) * tm

    x = x_ref[...].astype(jnp.bfloat16)

    # Layer 1: Linear(bias=False) -> ReLU -> dropout(0.5)
    h = jnp.dot(x, w1_ref[...], preferred_element_type=jnp.float32)
    h = jnp.maximum(h, 0.0)
    h = _dropout_half(h, seeds_ref[0].astype(jnp.uint32), row0)

    # Layer 2: Linear(bias=False) -> ReLU -> dropout(0.5)
    y = jnp.dot(h.astype(jnp.bfloat16), w2_ref[...], preferred_element_type=jnp.float32)
    y = jnp.maximum(y, 0.0)
    y = _dropout_half(y, seeds_ref[1].astype(jnp.uint32), row0)

    o_ref[...] = y.astype(o_ref.dtype)


def prenet_forward(x, weights, base_seed=0, tm=256):
    """Prenet forward.  x: [B, T, in_dim] -> [B, T, sizes[-1]].  Dropout always active."""
    # TODO(synk): generalize the fusion to >2 layers; the canonical Prenet has 2.
    assert len(weights) == 2, "fused kernel implements the standard 2-layer Prenet"
    w1, w2 = weights
    B, T, C = x.shape
    K, N1 = w1.shape
    N1b, N2 = w2.shape
    assert K == C and N1b == N1

    M = B * T
    h = x.reshape(M, C)

    # MXU-aligned row tile (multiple of 8 sublanes), clamped so tiny inputs run as
    # one grid step; pad rows so the grid covers any B*T.
    tm = max(8, min(tm, _round_up(M, 8)))
    Mp = _round_up(M, tm)
    if Mp != M:
        h = jnp.pad(h, ((0, Mp - M), (0, 0)))

    # bf16 operands for the MXU fast path (f32 accumulation inside the kernel).
    w1b = w1.astype(jnp.bfloat16)
    w2b = w2.astype(jnp.bfloat16)

    # One decorrelated seed per layer; the in-kernel mixer removes any correlation.
    seeds = jnp.array([base_seed, base_seed + 1000003], dtype=jnp.int32)

    out = pl.pallas_call(
        _prenet_fused_kernel,
        out_shape=jax.ShapeDtypeStruct((Mp, N2), x.dtype),
        grid_spec=pltpu.PrefetchScalarGridSpec(
            num_scalar_prefetch=1,                            # seeds land in SMEM
            grid=(Mp // tm,),
            in_specs=[
                pl.BlockSpec((tm, K), lambda i, s: (i, 0)),   # row tile of x
                pl.BlockSpec((K, N1), lambda i, s: (0, 0)),   # w1, VMEM-resident
                pl.BlockSpec((N1, N2), lambda i, s: (0, 0)),  # w2, VMEM-resident
            ],
            out_specs=pl.BlockSpec((tm, N2), lambda i, s: (i, 0)),
        ),
        compiler_params=pltpu.CompilerParams(
            dimension_semantics=("parallel",),                # independent row tiles
        ),
    )(seeds, h, w1b, w2b)

    if Mp != M:
        out = out[:M]
    return out.reshape(B, T, N2)


def make_prenet_weights(key, in_dim, sizes):
    """Deterministic Xavier-uniform init (LinearNorm default, gain='linear')."""
    in_sizes = [in_dim] + list(sizes[:-1])
    weights = []
    for i, (fan_in, fan_out) in enumerate(zip(in_sizes, sizes)):
        k = jax.random.fold_in(key, i)
        bound = (6.0 / (fan_in + fan_out)) ** 0.5
        # stored as [in, out] (transpose of PyTorch's [out, in])
        w = jax.random.uniform(k, (fan_in, fan_out), jnp.float32, -bound, bound)
        weights.append(w)
    return weights


if __name__ == "__main__":
    key = jax.random.PRNGKey(0)
    kx, kw = jax.random.split(key)

    # Small shapes consistent with the module: prev-mel frames -> bottleneck.
    B, T, in_dim = 2, 8, 32           # M = B*T = 16 rows
    sizes = [64, 32]                  # two Prenet layers

    x = jax.random.normal(kx, (B, T, in_dim), dtype=jnp.float32)
    weights = make_prenet_weights(kw, in_dim, sizes)

    out = prenet_forward(x, weights, base_seed=0)
    out = jax.block_until_ready(out)

    assert out.shape == (B, T, sizes[-1])
    assert out.dtype == jnp.float32
    assert bool(jnp.all(jnp.isfinite(out)))
    assert bool(jnp.all(out >= 0.0))                    # post-ReLU, scaled by {0, 2}
    zero_frac = float(jnp.mean(out == 0.0))
    assert 0.3 <= zero_frac <= 0.98                     # >=~50% zeros from dropout
    assert bool(jnp.any(out > 0.0))

    print("KERNEL_OK")
</pallas_src>

<mosaic_0001>
module attributes {stable_mosaic.version = 11 : i64} {
  func.func @_prenet_fused_kernel(%arg0: i32, %arg1: memref<2xi32, #tpu.memory_space<smem>>, %arg2: memref<16x32xf32, #tpu.memory_space<vmem>>, %arg3: memref<32x64xbf16, #tpu.memory_space<vmem>>, %arg4: memref<64x32xbf16, #tpu.memory_space<vmem>>, %arg5: memref<16x32xf32, #tpu.memory_space<vmem>>) attributes {dimension_semantics = [#tpu.dimension_semantics<parallel>], iteration_bounds = array<i64: 1>, scalar_prefetch = 1 : i64, scratch_operands = 0 : i64, tpu.core_type = #tpu.core_type<tc>, window_params = [{transform_indices = @transform_0, window_bounds = array<i64: 16, 32>}, {pipeline_mode = #tpu.pipeline_mode<synchronous>, transform_indices = @transform_1, window_bounds = array<i64: 32, 64>}, {pipeline_mode = #tpu.pipeline_mode<synchronous>, transform_indices = @transform_2, window_bounds = array<i64: 64, 32>}, {transform_indices = @transform_3, window_bounds = array<i64: 16, 32>}]} {
    %c16_i32 = arith.constant 16 : i32
    %0 = arith.muli %arg0, %c16_i32 : i32
    %c0 = arith.constant 0 : index
    %c0_0 = arith.constant 0 : index
    %1 = vector.load %arg2[%c0, %c0_0] : memref<16x32xf32, #tpu.memory_space<vmem>>, vector<16x32xf32>
    %2 = arith.truncf %1 : vector<16x32xf32> to vector<16x32xbf16>
    %c0_1 = arith.constant 0 : index
    %c0_2 = arith.constant 0 : index
    %3 = vector.load %arg3[%c0_1, %c0_2] : memref<32x64xbf16, #tpu.memory_space<vmem>>, vector<32x64xbf16>
    %cst = arith.constant dense<0.000000e+00> : vector<16x64xf32>
    %4 = tpu.matmul %2, %3, %cst {dimension_numbers = #tpu.dot_dimension_numbers<[1], [0], [0], [1], [0, 0, 1, 1], [], []>} : vector<16x32xbf16>, vector<32x64xbf16>, vector<16x64xf32> -> vector<16x64xf32>
    %cst_3 = arith.constant 0.000000e+00 : f32
    %5 = vector.broadcast %cst_3 : f32 to vector<16x64xf32>
    %6 = arith.maximumf %4, %5 : vector<16x64xf32>
    %c0_4 = arith.constant 0 : index
    %7 = memref.load %arg1[%c0_4] : memref<2xi32, #tpu.memory_space<smem>>
    %8 = tpu.iota {dimensions = array<i32: 0>} : vector<16x64xi32>
    %9 = vector.broadcast %0 : i32 to vector<16x64xi32>
    %10 = arith.addi %8, %9 : vector<16x64xi32>
    %11 = tpu.iota {dimensions = array<i32: 1>} : vector<16x64xi32>
    %c64_i32 = arith.constant 64 : i32
    %12 = vector.broadcast %c64_i32 : i32 to vector<16x64xi32>
    %13 = arith.muli %10, %12 : vector<16x64xi32>
    %14 = arith.addi %13, %11 : vector<16x64xi32>
    %c16_i32_5 = arith.constant 16 : i32
    %15 = vector.broadcast %c16_i32_5 : i32 to vector<16x64xi32>
    %16 = arith.shrui %14, %15 : vector<16x64xi32>
    %17 = arith.xori %14, %16 : vector<16x64xi32>
    %c2146121005_i32 = arith.constant 2146121005 : i32
    %18 = vector.broadcast %c2146121005_i32 : i32 to vector<16x64xi32>
    %19 = arith.muli %17, %18 : vector<16x64xi32>
    %c15_i32 = arith.constant 15 : i32
    %20 = vector.broadcast %c15_i32 : i32 to vector<16x64xi32>
    %21 = arith.shrui %19, %20 : vector<16x64xi32>
    %22 = arith.xori %19, %21 : vector<16x64xi32>
    %c-2073254261_i32 = arith.constant -2073254261 : i32
    %23 = vector.broadcast %c-2073254261_i32 : i32 to vector<16x64xi32>
    %24 = arith.muli %22, %23 : vector<16x64xi32>
    %c16_i32_6 = arith.constant 16 : i32
    %25 = vector.broadcast %c16_i32_6 : i32 to vector<16x64xi32>
    %26 = arith.shrui %24, %25 : vector<16x64xi32>
    %27 = arith.xori %24, %26 : vector<16x64xi32>
    %28 = vector.broadcast %7 : i32 to vector<16x64xi32>
    %29 = arith.xori %27, %28 : vector<16x64xi32>
    %c16_i32_7 = arith.constant 16 : i32
    %30 = vector.broadcast %c16_i32_7 : i32 to vector<16x64xi32>
    %31 = arith.shrui %29, %30 : vector<16x64xi32>
    %32 = arith.xori %29, %31 : vector<16x64xi32>
    %c2146121005_i32_8 = arith.constant 2146121005 : i32
    %33 = vector.broadcast %c2146121005_i32_8 : i32 to vector<16x64xi32>
    %34 = arith.muli %32, %33 : vector<16x64xi32>
    %c15_i32_9 = arith.constant 15 : i32
    %35 = vector.broadcast %c15_i32_9 : i32 to vector<16x64xi32>
    %36 = arith.shrui %34, %35 : vector<16x64xi32>
    %37 = arith.xori %34, %36 : vector<16x64xi32>
    %c-2073254261_i32_10 = arith.constant -2073254261 : i32
    %38 = vector.broadcast %c-2073254261_i32_10 : i32 to vector<16x64xi32>
    %39 = arith.muli %37, %38 : vector<16x64xi32>
    %c16_i32_11 = arith.constant 16 : i32
    %40 = vector.broadcast %c16_i32_11 : i32 to vector<16x64xi32>
    %41 = arith.shrui %39, %40 : vector<16x64xi32>
    %42 = arith.xori %39, %41 : vector<16x64xi32>
    %c31_i32 = arith.constant 31 : i32
    %43 = vector.broadcast %c31_i32 : i32 to vector<16x64xi32>
    %44 = arith.shrui %42, %43 : vector<16x64xi32>
    %c0_i32 = arith.constant 0 : i32
    %45 = vector.broadcast %c0_i32 : i32 to vector<16x64xi32>
    %46 = arith.cmpi eq, %44, %45 : vector<16x64xi32>
    %cst_12 = arith.constant 2.000000e+00 : f32
    %cst_13 = arith.constant 0.000000e+00 : f32
    %47 = vector.broadcast %cst_12 : f32 to vector<16x64xf32>
    %48 = vector.broadcast %cst_13 : f32 to vector<16x64xf32>
    %49 = arith.select %46, %47, %48 : vector<16x64xi1>, vector<16x64xf32>
    %50 = arith.mulf %6, %49 : vector<16x64xf32>
    %51 = arith.truncf %50 : vector<16x64xf32> to vector<16x64xbf16>
    %c0_14 = arith.constant 0 : index
    %c0_15 = arith.constant 0 : index
    %52 = vector.load %arg4[%c0_14, %c0_15] : memref<64x32xbf16, #tpu.memory_space<vmem>>, vector<64x32xbf16>
    %cst_16 = arith.constant dense<0.000000e+00> : vector<16x32xf32>
    %53 = tpu.matmul %51, %52, %cst_16 {dimension_numbers = #tpu.dot_dimension_numbers<[1], [0], [0], [1], [0, 0, 1, 1], [], []>} : vector<16x64xbf16>, vector<64x32xbf16>, vector<16x32xf32> -> vector<16x32xf32>
    %cst_17 = arith.constant 0.000000e+00 : f32
    %54 = vector.broadcast %cst_17 : f32 to vector<16x32xf32>
    %55 = arith.maximumf %53, %54 : vector<16x32xf32>
    %c1 = arith.constant 1 : index
    %56 = memref.load %arg1[%c1] : memref<2xi32, #tpu.memory_space<smem>>
    %57 = tpu.iota {dimensions = array<i32: 0>} : vector<16x32xi32>
    %58 = vector.broadcast %0 : i32 to vector<16x32xi32>
    %59 = arith.addi %57, %58 : vector<16x32xi32>
    %60 = tpu.iota {dimensions = array<i32: 1>} : vector<16x32xi32>
    %c32_i32 = arith.constant 32 : i32
    %61 = vector.broadcast %c32_i32 : i32 to vector<16x32xi32>
    %62 = arith.muli %59, %61 : vector<16x32xi32>
    %63 = arith.addi %62, %60 : vector<16x32xi32>
    %c16_i32_18 = arith.constant 16 : i32
    %64 = vector.broadcast %c16_i32_18 : i32 to vector<16x32xi32>
    %65 = arith.shrui %63, %64 : vector<16x32xi32>
    %66 = arith.xori %63, %65 : vector<16x32xi32>
    %c2146121005_i32_19 = arith.constant 2146121005 : i32
    %67 = vector.broadcast %c2146121005_i32_19 : i32 to vector<16x32xi32>
    %68 = arith.muli %66, %67 : vector<16x32xi32>
    %c15_i32_20 = arith.constant 15 : i32
    %69 = vector.broadcast %c15_i32_20 : i32 to vector<16x32xi32>
    %70 = arith.shrui %68, %69 : vector<16x32xi32>
    %71 = arith.xori %68, %70 : vector<16x32xi32>
    %c-2073254261_i32_21 = arith.constant -2073254261 : i32
    %72 = vector.broadcast %c-2073254261_i32_21 : i32 to vector<16x32xi32>
    %73 = arith.muli %71, %72 : vector<16x32xi32>
    %c16_i32_22 = arith.constant 16 : i32
    %74 = vector.broadcast %c16_i32_22 : i32 to vector<16x32xi32>
    %75 = arith.shrui %73, %74 : vector<16x32xi32>
    %76 = arith.xori %73, %75 : vector<16x32xi32>
    %77 = vector.broadcast %56 : i32 to vector<16x32xi32>
    %78 = arith.xori %76, %77 : vector<16x32xi32>
    %c16_i32_23 = arith.constant 16 : i32
    %79 = vector.broadcast %c16_i32_23 : i32 to vector<16x32xi32>
    %80 = arith.shrui %78, %79 : vector<16x32xi32>
    %81 = arith.xori %78, %80 : vector<16x32xi32>
    %c2146121005_i32_24 = arith.constant 2146121005 : i32
    %82 = vector.broadcast %c2146121005_i32_24 : i32 to vector<16x32xi32>
    %83 = arith.muli %81, %82 : vector<16x32xi32>
    %c15_i32_25 = arith.constant 15 : i32
    %84 = vector.broadcast %c15_i32_25 : i32 to vector<16x32xi32>
    %85 = arith.shrui %83, %84 : vector<16x32xi32>
    %86 = arith.xori %83, %85 : vector<16x32xi32>
    %c-2073254261_i32_26 = arith.constant -2073254261 : i32
    %87 = vector.broadcast %c-2073254261_i32_26 : i32 to vector<16x32xi32>
    %88 = arith.muli %86, %87 : vector<16x32xi32>
    %c16_i32_27 = arith.constant 16 : i32
    %89 = vector.broadcast %c16_i32_27 : i32 to vector<16x32xi32>
    %90 = arith.shrui %88, %89 : vector<16x32xi32>
    %91 = arith.xori %88, %90 : vector<16x32xi32>
    %c31_i32_28 = arith.constant 31 : i32
    %92 = vector.broadcast %c31_i32_28 : i32 to vector<16x32xi32>
    %93 = arith.shrui %91, %92 : vector<16x32xi32>
    %c0_i32_29 = arith.constant 0 : i32
    %94 = vector.broadcast %c0_i32_29 : i32 to vector<16x32xi32>
    %95 = arith.cmpi eq, %93, %94 : vector<16x32xi32>
    %cst_30 = arith.constant 2.000000e+00 : f32
    %cst_31 = arith.constant 0.000000e+00 : f32
    %96 = vector.broadcast %cst_30 : f32 to vector<16x32xf32>
    %97 = vector.broadcast %cst_31 : f32 to vector<16x32xf32>
    %98 = arith.select %95, %96, %97 : vector<16x32xi1>, vector<16x32xf32>
    %99 = arith.mulf %55, %98 : vector<16x32xf32>
    %c0_32 = arith.constant 0 : index
    %c0_33 = arith.constant 0 : index
    %100 = vector.load %arg5[%c0_32, %c0_33] : memref<16x32xf32, #tpu.memory_space<vmem>>, vector<16x32xf32>
    tpu.vector_store %arg5[%c0_32, %c0_33], %99 {strides = array<i32>} : memref<16x32xf32, #tpu.memory_space<vmem>>, vector<16x32xf32>,
    return
  }
  func.func @transform_0(%arg0: i32, %arg1: memref<2xi32, #tpu.memory_space<smem>>) -> (i32, i32) {
    %c0_i32 = arith.constant 0 : i32
    %c0_i32_0 = arith.constant 0 : i32
    return %arg0, %c0_i32 : i32, i32
  }
  func.func @transform_1(%arg0: i32, %arg1: memref<2xi32, #tpu.memory_space<smem>>) -> (i32, i32) {
    %c0_i32 = arith.constant 0 : i32
    %c0_i32_0 = arith.constant 0 : i32
    %c0_i32_1 = arith.constant 0 : i32
    return %c0_i32, %c0_i32_0 : i32, i32
  }
  func.func @transform_2(%arg0: i32, %arg1: memref<2xi32, #tpu.memory_space<smem>>) -> (i32, i32) {
    %c0_i32 = arith.constant 0 : i32
    %c0_i32_0 = arith.constant 0 : i32
    %c0_i32_1 = arith.constant 0 : i32
    return %c0_i32, %c0_i32_0 : i32, i32
  }
  func.func @transform_3(%arg0: i32, %arg1: memref<2xi32, #tpu.memory_space<smem>>) -> (i32, i32) {
    %c0_i32 = arith.constant 0 : i32
    %c0_i32_0 = arith.constant 0 : i32
    return %arg0, %c0_i32 : i32, i32
  }
}

</mosaic_0001>

<llo_original>
// kernel: tpu_custom_call.1
$region0: #{tpu_custom_call.1}
  #allocation0 [shape = 'u32[]', space=smem, size = 0x4, offset = 0x4, fixed_abs, tag = 'smem constant byte address 0x4 - core index']
  #allocation1 [shape = 'u32[144,128]{1,0:T(1,128)}', space=vmem, size = 0x12000, scoped, tag = 'internal scratch']
  #allocation2 [shape = 's32[1]{0}', space=sflag, size = 0x4, scoped, tag = 'scoped memory for tpu_custom_call.1']
  #allocation3 [shape = 'u8[512]{0}', space=smem, size = 0x200, scoped, tag = 'prefetched SMEM operand 0']
  %s0 = inlined_call_operand.vmem [shape: s32[2], index: 0, kind: input, shape index: {}]
  %s1 = inlined_call_operand.vmem [shape: f32[16,32], index: 1, kind: input, shape index: {}]
  %s2 = inlined_call_operand.vmem [shape: bf16[32,64], index: 2, kind: input, shape index: {}]
  %s3 = inlined_call_operand.vmem [shape: bf16[64,32], index: 3, kind: input, shape index: {}]
  %s4 = inlined_call_operand.hbm [shape: f32[16,32], index: 4, kind: output, shape index: {}]
  %s5 = sld [smem:[#allocation0]]
  $region22: #{tpu_custom_call.1} parent=0
    _
  %s7 = ssub.s32 1, %s5
  %s8 = scalar_select 0, %s7, %s5
  %s9 = sshll.u32 %s0, 4
  %s10 = int_to_ptr.vmem [resolvable:$true] %s9
  %12 = dma.vmem_to_smem %s10, 16, [#allocation3], [#allocation2]
  %13 = dma.done [#allocation2], 16
  %14 = sfence
  $region1: #{tpu_custom_call.1} parent=0
    #allocation4 [shape = 'u8[8192]{0}', space=vmem, size = 0x2000, scoped, tag = 'output window, operand 0, single buffered']
    #allocation5 [shape = 's32[1]{0}', space=sflag, size = 0x4, scoped, tag = 'scoped memory for tpu_custom_call.1']
    %15 = vsyncpa [#allocation5], 0
    // Predicated region
    $region2: #{tpu_custom_call.1} parent=1 // pred_check
      _
    $region3: #{tpu_custom_call.1} parent=1 // pred_check_branch
      %17 = sbr.rel (0) target = $region5
    $region4: #{tpu_custom_call.1} parent=1 // pred_region
      _
    $region5: #{tpu_custom_call.1} parent=1 // pred_fallthru
      _
    // Predicated region
    $region6: #{tpu_custom_call.1} parent=1 // pred_check
      _
    $region7: #{tpu_custom_call.1} parent=1 // pred_check_branch
      %19 = sbr.rel (0) target = $region9
    $region8: #{tpu_custom_call.1} parent=1 // pred_region
      _
    $region9: #{tpu_custom_call.1} parent=1 // pred_fallthru
      _
    // Predicated region
    $region10: #{tpu_custom_call.1} parent=1 // pred_check
      _
    $region11: #{tpu_custom_call.1} parent=1 // pred_check_branch
      %21 = sbr.rel (0) target = $region13
    $region12: #{tpu_custom_call.1} parent=1 // pred_region
      _
    $region13: #{tpu_custom_call.1} parent=1 // pred_fallthru
      _
    %s23 = smul.u32 0, 16
    %v24 = vld [vmem:[%s1] sm:$0xff]
    %v25 = vld [vmem:[%s1 + $0x8] sm:$0xff]
    %v26 = vpack.c.bf16 %v25, %v24
    %v27 = vld [vmem:[%s2] sm:$0xf]
    %v28 = vld [vmem:[%s2 + $0x4] sm:$0xf]
    %v29 = vld [vmem:[%s2 + $0x8] sm:$0xf]
    %v30 = vld [vmem:[%s2 + $0xc] sm:$0xf]
    %v35 = vunpack.c.l.b16 %v27
    %v36 = vunpack.c.l.b16 %v28
    %v37 = vunpack.c.l.b16 %v29
    %v38 = vunpack.c.l.b16 %v30
    %v39 = vpack.c.b16 %v36, %v35
    %v40 = vpack.c.b16 %v38, %v37
    %vm43 = vcmask 261120
    %v45 = vsel %vm43, %v26, 0
    %47 = vmatprep.subr.bf16.mxu0 0
    %48 = vmatpush1.bf16.msra.mxu0 0
    %49 = vmatprep.subr.bf16.mxu0 0
    %50 = vmatpush1.bf16.msra.mxu0 0
    %51 = vmatprep.subr.bf16.mxu0 0
    %52 = vmatpush1.bf16.msra.mxu0 0
    %53 = vmatprep.subr.bf16.mxu0 0
    %54 = vmatpush1.bf16.msra.mxu0 0
    %55 = vmatprep.subr.bf16.mxu0 0
    %56 = vmatpush1.bf16.msra.mxu0 0
    %57 = vmatprep.subr.bf16.mxu0 0
    %58 = vmatpush1.bf16.msra.mxu0 0
    %59 = vmatprep.subr.bf16.mxu0 0
    %60 = vmatpush1.bf16.msra.mxu0 %v40
    %61 = vmatprep.subr.bf16.mxu0 0
    %62 = vmatpush1.bf16.msra.mxu0 %v39
    %63 = vmatprep.subr.bf16.mxu0 0
    %64 = vmatpush2.bf16.msra.mxu0 0
    %65 = vmatprep.subr.bf16.mxu0 0
    %66 = vmatpush2.bf16.msra.mxu0 0
    %67 = vmatprep.subr.bf16.mxu0 0
    %68 = vmatpush2.bf16.msra.mxu0 0
    %69 = vmatprep.subr.bf16.mxu0 0
    %70 = vmatpush2.bf16.msra.mxu0 0
    %71 = vmatprep.subr.bf16.mxu0 0
    %72 = vmatpush2.bf16.msra.mxu0 0
    %73 = vmatprep.subr.bf16.mxu0 0
    %74 = vmatpush2.bf16.msra.mxu0 0
    %75 = vmatprep.subr.bf16.mxu0 0
    %76 = vmatpush2.bf16.msra.mxu0 0
    %77 = vmatprep.subr.bf16.mxu0 0
    %78 = vmatpush2.bf16.msra.mxu0 0
    %79 = vmatprep.mubr.bf16.mxu0 0
    %80 = vmatmul.mubr.bf16.gmra.mxu0 %v45
    %v81 = vpop.f32.mrf.mxu0
    %v82 = vadd.f32 0.0, %v81
    %v83 = vpop.f32.mrf.mxu0
    %v84 = vpop.f32.mrf.mxu0
    %v85 = vadd.f32 0.0, %v84
    %v86 = vpop.f32.mrf.mxu0
    %87 = vdwg.mxu0
    %v88 = vmax.f32 %v82, 0.0
    %v89 = vmax.f32 %v85, 0.0
    %s90 = sld [smem:[#allocation3]]
    %v91 = vlaneseq
    %v92 = vshrl.u32 %v91, 7
    %v93 = vadd.s32 %v92, 8
    %v94 = vstv %s23
    %v95 = vadd.s32 %v92, %v94
    %v96 = vadd.s32 %v93, %v94
    %v97 = vlaneseq
    %v98 = vand.u32 %v97, 127
    %v99 = vmul.u32 %v95, 64
    %v100 = vmul.u32 %v96, 64
    %v101 = vadd.s32 %v99, %v98
    %v102 = vadd.s32 %v100, %v98
    %v103 = vshrl.u32 %v101, 16
    %v104 = vshrl.u32 %v102, 16
    %v105 = vxor.u32 %v101, %v103
    %v106 = vxor.u32 %v102, %v104
    %v107 = vmul.u32 %v105, 2146121005
    %v108 = vmul.u32 %v106, 2146121005
    %v109 = vshrl.u32 %v107, 15
    %v110 = vshrl.u32 %v108, 15
    %v111 = vxor.u32 %v107, %v109
    %v112 = vxor.u32 %v108, %v110
    %v113 = vmul.u32 %v111, 2221713035
    %v114 = vmul.u32 %v112, 2221713035
    %v115 = vshrl.u32 %v113, 16
    %v116 = vshrl.u32 %v114, 16
    %v117 = vxor.u32 %v113, %v115
    %v118 = vxor.u32 %v114, %v116
    %v119 = vstv %s90
    %v120 = vxor.u32 %v117, %v119
    %v121 = vxor.u32 %v118, %v119
    %v122 = vshrl.u32 %v120, 16
    %v123 = vshrl.u32 %v121, 16
    %v124 = vxor.u32 %v120, %v122
    %v125 = vxor.u32 %v121, %v123
    %v126 = vmul.u32 %v124, 2146121005
    %v127 = vmul.u32 %v125, 2146121005
    %v128 = vshrl.u32 %v126, 15
    %v129 = vshrl.u32 %v127, 15
    %v130 = vxor.u32 %v126, %v128
    %v131 = vxor.u32 %v127, %v129
    %v132 = vmul.u32 %v130, 2221713035
    %v133 = vmul.u32 %v131, 2221713035
    %v134 = vshrl.u32 %v132, 16
    %v135 = vshrl.u32 %v133, 16
    %v136 = vxor.u32 %v132, %v134
    %v137 = vxor.u32 %v133, %v135
    %v138 = vshrl.u32 %v136, 31
    %v139 = vshrl.u32 %v137, 31
    %vm140 = vcmp.eq.s32.totalorder %v138, 0
    %vm141 = vcmp.eq.s32.totalorder %v139, 0
    %v142 = vsel %vm140, 2.0, 0.0
    %v143 = vsel %vm141, 2.0, 0.0
    %v144 = vmul.f32 %v88, %v142
    %v145 = vmul.f32 %v89, %v143
    %v146 = vpack.c.bf16 %v145, %v144
    %v147 = vld [vmem:[%s3] sm:$0xf]
    %v148 = vld [vmem:[%s3 + $0x4] sm:$0xf]
    %v149 = vld [vmem:[%s3 + $0x8] sm:$0xf]
    %v150 = vld [vmem:[%s3 + $0xc] sm:$0xf]
    %v151 = vld [vmem:[%s3 + $0x10] sm:$0xf]
    %v152 = vld [vmem:[%s3 + $0x14] sm:$0xf]
    %v153 = vld [vmem:[%s3 + $0x18] sm:$0xf]
    %v154 = vld [vmem:[%s3 + $0x1c] sm:$0xf]
    %v163 = vunpack.c.l.b16 %v147
    %v164 = vunpack.c.l.b16 %v148
    %v165 = vunpack.c.l.b16 %v149
    %v166 = vunpack.c.l.b16 %v150
    %v167 = vunpack.c.l.b16 %v151
    %v168 = vunpack.c.l.b16 %v152
    %v169 = vunpack.c.l.b16 %v153
    %v170 = vunpack.c.l.b16 %v154
    %v171 = vpack.c.b16 %v164, %v163
    %v172 = vpack.c.b16 %v166, %v165
    %v173 = vpack.c.b16 %v168, %v167
    %v174 = vpack.c.b16 %v170, %v169
    %vm179 = vcmask 523264
    %v181 = vsel %vm179, %v146, 0
    %183 = vmatprep.subr.bf16.mxu0 0
    %184 = vmatpush1.bf16.msra.mxu0 0
    %185 = vmatprep.subr.bf16.mxu0 0
    %186 = vmatpush1.bf16.msra.mxu0 0
    %187 = vmatprep.subr.bf16.mxu0 0
    %188 = vmatpush1.bf16.msra.mxu0 0
    %189 = vmatprep.subr.bf16.mxu0 0
    %190 = vmatpush1.bf16.msra.mxu0 0
    %191 = vmatprep.subr.bf16.mxu0 0
    %192 = vmatpush1.bf16.msra.mxu0 %v174
    %193 = vmatprep.subr.bf16.mxu0 0
    %194 = vmatpush1.bf16.msra.mxu0 %v173
    %195 = vmatprep.subr.bf16.mxu0 0
    %196 = vmatpush1.bf16.msra.mxu0 %v172
    %197 = vmatprep.subr.bf16.mxu0 0
    %198 = vmatpush1.bf16.msra.mxu0 %v171
    %199 = vmatprep.subr.bf16.mxu0 0
    %200 = vmatpush2.bf16.msra.mxu0 0
    %201 = vmatprep.subr.bf16.mxu0 0
    %202 = vmatpush2.bf16.msra.mxu0 0
    %203 = vmatprep.subr.bf16.mxu0 0
    %204 = vmatpush2.bf16.msra.mxu0 0
    %205 = vmatprep.subr.bf16.mxu0 0
    %206 = vmatpush2.bf16.msra.mxu0 0
    %207 = vmatprep.subr.bf16.mxu0 0
    %208 = vmatpush2.bf16.msra.mxu0 0
    %209 = vmatprep.subr.bf16.mxu0 0
    %210 = vmatpush2.bf16.msra.mxu0 0
    %211 = vmatprep.subr.bf16.mxu0 0
    %212 = vmatpush2.bf16.msra.mxu0 0
    %213 = vmatprep.subr.bf16.mxu0 0
    %214 = vmatpush2.bf16.msra.mxu0 0
    %215 = vmatprep.mubr.bf16.mxu0 0
    %216 = vmatmul.mubr.bf16.gmra.mxu0 %v181
    %v217 = vpop.f32.mrf.mxu0
    %v218 = vadd.f32 0.0, %v217
    %v219 = vpop.f32.mrf.mxu0
    %v220 = vpop.f32.mrf.mxu0
    %v221 = vadd.f32 0.0, %v220
    %v222 = vpop.f32.mrf.mxu0
    %223 = vdwg.mxu0
    %v224 = vmax.f32 %v218, 0.0
    %v225 = vmax.f32 %v221, 0.0
    %s226 = sld [smem:[#allocation3 + $0x1]]
    %v227 = vmul.u32 %v95, 32
    %v228 = vmul.u32 %v96, 32
    %v229 = vadd.s32 %v227, %v98
    %v230 = vadd.s32 %v228, %v98
    %v231 = vshrl.u32 %v229, 16
    %v232 = vshrl.u32 %v230, 16
    %v233 = vxor.u32 %v229, %v231
    %v234 = vxor.u32 %v230, %v232
    %v235 = vmul.u32 %v233, 2146121005
    %v236 = vmul.u32 %v234, 2146121005
    %v237 = vshrl.u32 %v235, 15
    %v238 = vshrl.u32 %v236, 15
    %v239 = vxor.u32 %v235, %v237
    %v240 = vxor.u32 %v236, %v238
    %v241 = vmul.u32 %v239, 2221713035
    %v242 = vmul.u32 %v240, 2221713035
    %v243 = vshrl.u32 %v241, 16
    %v244 = vshrl.u32 %v242, 16
    %v245 = vxor.u32 %v241, %v243
    %v246 = vxor.u32 %v242, %v244
    %v247 = vstv %s226
    %v248 = vxor.u32 %v245, %v247
    %v249 = vxor.u32 %v246, %v247
    %v250 = vshrl.u32 %v248, 16
    %v251 = vshrl.u32 %v249, 16
    %v252 = vxor.u32 %v248, %v250
    %v253 = vxor.u32 %v249, %v251
    %v254 = vmul.u32 %v252, 2146121005
    %v255 = vmul.u32 %v253, 2146121005
    %v256 = vshrl.u32 %v254, 15
    %v257 = vshrl.u32 %v255, 15
    %v258 = vxor.u32 %v254, %v256
    %v259 = vxor.u32 %v255, %v257
    %v260 = vmul.u32 %v258, 2221713035
    %v261 = vmul.u32 %v259, 2221713035
    %v262 = vshrl.u32 %v260, 16
    %v263 = vshrl.u32 %v261, 16
    %v264 = vxor.u32 %v260, %v262
    %v265 = vxor.u32 %v261, %v263
    %v266 = vshrl.u32 %v264, 31
    %v267 = vshrl.u32 %v265, 31
    %vm268 = vcmp.eq.s32.totalorder %v266, 0
    %vm269 = vcmp.eq.s32.totalorder %v267, 0
    %v270 = vsel %vm268, 2.0, 0.0
    %v271 = vsel %vm269, 2.0, 0.0
    %v272 = vmul.f32 %v224, %v270
    %v273 = vmul.f32 %v225, %v271
    %274 = vst.msk [vmem:[#allocation4] sm:$0xff] %vm43, %v272
    %275 = vst.msk [vmem:[#allocation4 + $0x8] sm:$0xff] %vm43, %v273
    // Predicated region
    $region14: #{tpu_custom_call.1} parent=1 // pred_check
      _
    $region15: #{tpu_custom_call.1} parent=1 // pred_check_branch
      %277 = sbr.rel (0) target = $region17
    $region16: #{tpu_custom_call.1} parent=1 // pred_region
      %s279 = ssub.s32 256, 256
      %280 = vsyncadd [#allocation5], %s279
      %s281 = sshll.u32 [#allocation4], 4
      %s282 = int_to_ptr.vmem [resolvable:$true] %s281
      %287 = dma.vmem_to_hbm [thread:$0]  %s282, 256, %s4, [#allocation5], 128, 128, 8
    $region17: #{tpu_custom_call.1} parent=1 // pred_fallthru
      _
    // Predicated region
    $region18: #{tpu_custom_call.1} parent=1 // pred_check
      _
    $region19: #{tpu_custom_call.1} parent=1 // pred_check_branch
      %289 = sbr.rel (0) target = $region21
    $region20: #{tpu_custom_call.1} parent=1 // pred_region
      %290 = dma.done [#allocation5], 256
    $region21: #{tpu_custom_call.1} parent=1 // pred_fallthru
      _
    %291 = vsyncpa [#allocation5], 1

</llo_original>
